<compile_context>
chip_gen: v7x
topology: tpu7x:2x2x1
jax: 0.10.0
libtpu: 0.0.40
codegen_flags: <defaults>
</compile_context>

<pallas_src>
import functools

import jax
import jax.numpy as jnp
from jax import lax
from jax.experimental import pallas as pl
from jax.experimental.pallas import tpu as pltpu

_VMEM_LIMIT = 32 * 1024 * 1024        # scoped-VMEM default on every generation
_TILE_BUDGET = 26 * 1024 * 1024       # working-set budget (headroom under limit)


def _hmax3(x, lane_masked):
    """Horizontal 3-wide max.  If `lane_masked` is False the array has at least
    one -inf padding column, so the roll wrap-around is harmless and the
    lane-border masks (iota + 2 cmp + 2 select) are dropped."""
    w = x.shape[-1]
    neg_inf = jnp.float32(-jnp.inf)
    left = pltpu.roll(x, 1, 1)          # x[:, j-1]  (col 0 receives col w-1)
    right = pltpu.roll(x, w - 1, 1)     # x[:, j+1]  (col w-1 receives col 0)
    if lane_masked:
        c = lax.broadcasted_iota(jnp.int32, x.shape, 1)
        left = jnp.where(c > 0, left, neg_inf)
        right = jnp.where(c < w - 1, right, neg_inf)
    return jnp.maximum(x, jnp.maximum(left, right))


def _nms_kernel_tiled(rep_ref, top_ref, bot_ref, rel_ref, out_ref, *,
                      rel_thr, rep_thr, lane_masked):
    """Multi-tile variant: the H axis is tiled; 8-row halo blocks supply the
    single rows just above/below this tile."""
    rep = rep_ref[...]                   # (TH, W) float32, current H tile
    rel = rel_ref[...]                   # (TH, W) float32
    th, w = rep.shape
    neg_inf = jnp.float32(-jnp.inf)

    t = pl.program_id(2)                 # H-tile index
    n_t = pl.num_programs(2)

    hmax = _hmax3(rep, lane_masked)                                  # (TH, W)

    # Halo rows just above / below this tile (clamped DMA at the image edges);
    # scalar-conditioned -inf masking reproduces MaxPool2d's border padding.
    top_row = _hmax3(top_ref[pl.ds(7, 1), :], lane_masked)           # (1, W)
    bot_row = _hmax3(bot_ref[pl.ds(0, 1), :], lane_masked)           # (1, W)
    top_row = jnp.where(t > 0, top_row, neg_inf)
    bot_row = jnp.where(t < n_t - 1, bot_row, neg_inf)

    # Vertical 3-wide max: sublane rolls, wrapped rows patched with the halos.
    row = lax.broadcasted_iota(jnp.int32, (th, w), 0)
    up = jnp.where(row == 0, top_row, pltpu.roll(hmax, 1, 0))        # hmax[r-1]
    down = jnp.where(row == th - 1, bot_row, pltpu.roll(hmax, th - 1, 0))
    m = jnp.maximum(hmax, jnp.maximum(up, down))     # 3x3 max pool, -inf padded

    maxima = (rep == m) & (rep >= rep_thr) & (rel >= rel_thr)
    out_ref[...] = maxima.astype(jnp.int8)


def _nms_kernel_single(rep_ref, rel_ref, out_ref, *, rel_thr, rep_thr,
                       lane_masked):
    """Single-tile variant: the whole (padded) plane is one block — no halo
    inputs, no halo DMA."""
    rep = rep_ref[...]
    rel = rel_ref[...]
    th, w = rep.shape
    neg_inf = jnp.float32(-jnp.inf)

    hmax = _hmax3(rep, lane_masked)
    row = lax.broadcasted_iota(jnp.int32, (th, w), 0)
    up = jnp.where(row == 0, neg_inf, pltpu.roll(hmax, 1, 0))
    down = jnp.where(row == th - 1, neg_inf, pltpu.roll(hmax, th - 1, 0))
    m = jnp.maximum(hmax, jnp.maximum(up, down))

    maxima = (rep == m) & (rep >= rep_thr) & (rel >= rel_thr)
    out_ref[...] = maxima.astype(jnp.int8)


def _choose_tiling(H, w_pad):
    """Returns (tile_h, h_pad, single_tile).

    Small planes run as one tile (no halos).  Otherwise pick the largest
    tile_h in {256,128,64,32} whose double-buffered working set
    (~18*tile_h*w_pad + 128*w_pad bytes) fits the VMEM budget while keeping
    >= 2 H-tiles so v7x can shard across both TensorCores."""
    h32 = pl.cdiv(H, 32) * 32            # int8-friendly (32, 128) tiling
    if h32 <= 256 and 18 * h32 * w_pad <= _TILE_BUDGET:
        return h32, h32, True
    for tile_h in (256, 128, 64, 32):
        fits = 18 * tile_h * w_pad + 128 * w_pad <= _TILE_BUDGET
        if fits and pl.cdiv(H, tile_h) >= 2:
            return tile_h, pl.cdiv(H, tile_h) * tile_h, False
    tile_h = 32
    return tile_h, pl.cdiv(H, tile_h) * tile_h, False


def _nms_mask_padded(repeatability, reliability, rel_thr, rep_thr):
    """Runs the kernel; returns the padded int8 mask and the original (H, W).
    Padded cells are guaranteed 0 (rep = -inf fails the threshold)."""
    rep = jnp.asarray(repeatability, jnp.float32)
    rel = jnp.asarray(reliability, jnp.float32)
    B, C, H, W = rep.shape

    w_pad = pl.cdiv(W, 128) * 128        # lane-dense last dim (unmasked stores)
    lane_masked = (w_pad == W)           # no -inf lane padding -> keep masks
    tile_h, h_pad, single = _choose_tiling(H, w_pad)

    if (h_pad, w_pad) != (H, W):
        pad = ((0, 0), (0, 0), (0, h_pad - H), (0, w_pad - W))
        # -inf repeatability padding == MaxPool2d's -inf border padding, and a
        # padded cell can never pass the rep threshold -> never a maximum.
        rep = jnp.pad(rep, pad, constant_values=-jnp.inf)
        rel = jnp.pad(rel, pad, constant_values=0.0)

    out_shape = jax.ShapeDtypeStruct((B, C, h_pad, w_pad), jnp.int8)

    if single:
        kernel = functools.partial(_nms_kernel_single, rel_thr=rel_thr,
                                   rep_thr=rep_thr, lane_masked=lane_masked)
        plane_spec = pl.BlockSpec((None, None, h_pad, w_pad),
                                  lambda b, c: (b, c, 0, 0))
        mask = pl.pallas_call(
            kernel,
            out_shape=out_shape,
            grid=(B, C),
            in_specs=[plane_spec, plane_spec],
            out_specs=pl.BlockSpec((None, None, h_pad, w_pad),
                                   lambda b, c: (b, c, 0, 0)),
            compiler_params=pltpu.CompilerParams(
                dimension_semantics=("parallel", "parallel"),
                vmem_limit_bytes=_VMEM_LIMIT),
        )(rep, rel)
        return mask, (H, W)

    n_tiles = h_pad // tile_h
    r8 = tile_h // 8                     # halo blocks are 8 rows tall

    kernel = functools.partial(_nms_kernel_tiled, rel_thr=rel_thr,
                               rep_thr=rep_thr, lane_masked=lane_masked)
    tile_spec = pl.BlockSpec((None, None, tile_h, w_pad),
                             lambda b, c, t: (b, c, t, 0))
    # 8-row halo blocks (8-sublane aligned): the row just above the tile is
    # row 7 of block t*r8 - 1; the row just below is row 0 of block (t+1)*r8.
    # Clamped at the image edges; clamped values are -inf-masked in-kernel via
    # the scalar t>0 / t<n_tiles-1 conditions — no OOB reads ever.
    top_spec = pl.BlockSpec(
        (None, None, 8, w_pad),
        lambda b, c, t: (b, c, jnp.maximum(t * r8 - 1, 0), 0))
    bot_spec = pl.BlockSpec(
        (None, None, 8, w_pad),
        lambda b, c, t: (b, c, jnp.minimum((t + 1) * r8, n_tiles * r8 - 1), 0))

    mask = pl.pallas_call(
        kernel,
        out_shape=out_shape,
        grid=(B, C, n_tiles),
        in_specs=[tile_spec, top_spec, bot_spec, tile_spec],
        out_specs=pl.BlockSpec((None, None, tile_h, w_pad),
                               lambda b, c, t: (b, c, t, 0)),
        compiler_params=pltpu.CompilerParams(
            dimension_semantics=("parallel", "parallel", "parallel"),
            vmem_limit_bytes=_VMEM_LIMIT),
    )(rep, rep, rep, rel)
    return mask, (H, W)


def nms_mask(repeatability, reliability, rel_thr=0.7, rep_thr=0.7):
    """Returns the int8 {0,1} maxima mask with shape (B, C, H, W)."""
    mask, (H, W) = _nms_mask_padded(repeatability, reliability, rel_thr, rep_thr)
    return mask[:, :, :H, :W]


class NonMaxSuppression:
    """JAX/Pallas port of r2d2's NonMaxSuppression (no learnable parameters)."""

    def __init__(self, rel_thr=0.7, rep_thr=0.7):
        self.rel_thr = rel_thr
        self.rep_thr = rep_thr

    def __call__(self, reliability, repeatability, **kw):
        assert len(reliability) == len(repeatability) == 1
        rel, rep = reliability[0], repeatability[0]
        # Padded cells are guaranteed 0, so nonzero() on the padded mask yields
        # identical (y, x) coordinates and skips a full slicing pass over HBM.
        mask, _ = _nms_mask_padded(rep, rel, self.rel_thr, self.rep_thr)
        # TODO(synk): nonzero() has data-dependent output size -> eager JAX, not Pallas.
        idx = jnp.stack(jnp.nonzero(mask))   # (4, N), row-major like torch.nonzero
        return idx[2:4]                      # rows 2:4 of nonzero().t() -> (y, x)


def _reference_mask(rep, rel, rel_thr, rep_thr):
    """Plain-JAX reference (lax.reduce_window max pool) for verification."""
    pooled = lax.reduce_window(
        rep, -jnp.inf, lax.max,
        window_dimensions=(1, 1, 3, 3),
        window_strides=(1, 1, 1, 1),
        padding="SAME")
    return ((rep == pooled) & (rep >= rep_thr) & (rel >= rel_thr)).astype(jnp.int8)


if __name__ == "__main__":
    key = jax.random.PRNGKey(0)
    ks = jax.random.split(key, 8)

    def check(rep, rel, rel_thr=0.7, rep_thr=0.7):
        mask = jax.block_until_ready(nms_mask(rep, rel, rel_thr, rep_thr))
        ref = _reference_mask(rep, rel, rel_thr, rep_thr)
        assert jnp.array_equal(mask, ref), f"mask mismatch for shape {rep.shape}"
        return ref

    nms = NonMaxSuppression(rel_thr=0.7, rep_thr=0.7)

    # Case 1: aligned W, small H -> single-tile (no-halo) kernel, masked hmax3.
    B, C, H, W = 2, 1, 96, 128   # NCHW, C=1 like r2d2 score maps
    rep1 = jax.random.uniform(ks[0], (B, C, H, W), dtype=jnp.float32)
    rel1 = jax.random.uniform(ks[1], (B, C, H, W), dtype=jnp.float32)
    ref1 = check(rep1, rel1)
    coords1 = jax.block_until_ready(nms([rel1], [rep1]))
    assert jnp.array_equal(coords1, jnp.stack(jnp.nonzero(ref1))[2:4])
    assert coords1.shape[0] == 2

    # Case 2: unaligned H/W -> -inf padding, unmasked hmax3, padded nonzero path.
    rep2 = jax.random.uniform(ks[2], (1, 1, 50, 70), dtype=jnp.float32)
    rel2 = jax.random.uniform(ks[3], (1, 1, 50, 70), dtype=jnp.float32)
    ref2 = check(rep2, rel2)
    coords2 = jax.block_until_ready(nms([rel2], [rep2]))
    assert jnp.array_equal(coords2, jnp.stack(jnp.nonzero(ref2))[2:4])

    # Case 3: H > 256 -> multi-tile kernel with halo rows (aligned W).
    rep3 = jax.random.uniform(ks[4], (1, 1, 288, 128), dtype=jnp.float32)
    rel3 = jax.random.uniform(ks[5], (1, 1, 288, 128), dtype=jnp.float32)
    check(rep3, rel3)

    # Case 4: multi-tile kernel, unaligned W (unmasked hmax3 in tiled path).
    rep4 = jax.random.uniform(ks[6], (1, 1, 288, 200), dtype=jnp.float32)
    rel4 = jax.random.uniform(ks[7], (1, 1, 288, 200), dtype=jnp.float32)
    check(rep4, rel4)

    print("KERNEL_OK")
</pallas_src>

<mosaic_0001>
module attributes {stable_mosaic.version = 11 : i64} {
  func.func @_nms_kernel_single(%arg0: i32, %arg1: i32, %arg2: memref<1x1x96x128xf32, #tpu.memory_space<vmem>>, %arg3: memref<1x1x96x128xf32, #tpu.memory_space<vmem>>, %arg4: memref<1x1x96x128xi8, #tpu.memory_space<vmem>>) attributes {dimension_semantics = [#tpu.dimension_semantics<parallel>, #tpu.dimension_semantics<parallel>], iteration_bounds = array<i64: 2, 1>, scalar_prefetch = 0 : i64, scratch_operands = 0 : i64, tpu.core_type = #tpu.core_type<tc>, window_params = [{transform_indices = @transform_0, window_bounds = array<i64: 1, 1, 96, 128>}, {transform_indices = @transform_1, window_bounds = array<i64: 1, 1, 96, 128>}, {transform_indices = @transform_2, window_bounds = array<i64: 1, 1, 96, 128>}]} {
    %c0 = arith.constant 0 : index
    %c0_0 = arith.constant 0 : index
    %c0_1 = arith.constant 0 : index
    %c0_2 = arith.constant 0 : index
    %0 = vector.load %arg2[%c0, %c0_0, %c0_1, %c0_2] : memref<1x1x96x128xf32, #tpu.memory_space<vmem>>, vector<1x1x96x128xf32>
    %1 = vector.shape_cast %0 : vector<1x1x96x128xf32> to vector<96x128xf32>
    %c0_3 = arith.constant 0 : index
    %c0_4 = arith.constant 0 : index
    %c0_5 = arith.constant 0 : index
    %c0_6 = arith.constant 0 : index
    %2 = vector.load %arg3[%c0_3, %c0_4, %c0_5, %c0_6] : memref<1x1x96x128xf32, #tpu.memory_space<vmem>>, vector<1x1x96x128xf32>
    %3 = vector.shape_cast %2 : vector<1x1x96x128xf32> to vector<96x128xf32>
    %c1_i32 = arith.constant 1 : i32
    %4 = tpu.dynamic_rotate %1 by %c1_i32 dim 1 : vector<96x128xf32>, i32 -> vector<96x128xf32>
    %c127_i32 = arith.constant 127 : i32
    %5 = tpu.dynamic_rotate %1 by %c127_i32 dim 1 : vector<96x128xf32>, i32 -> vector<96x128xf32>
    %6 = tpu.iota {dimensions = array<i32: 1>} : vector<96x128xi32>
    %c0_i32 = arith.constant 0 : i32
    %7 = vector.broadcast %c0_i32 : i32 to vector<96x128xi32>
    %8 = arith.cmpi sgt, %6, %7 : vector<96x128xi32>
    %cst = arith.constant 0xFF800000 : f32
    %9 = vector.broadcast %cst : f32 to vector<96x128xf32>
    %10 = arith.select %8, %4, %9 : vector<96x128xi1>, vector<96x128xf32>
    %c127_i32_7 = arith.constant 127 : i32
    %11 = vector.broadcast %c127_i32_7 : i32 to vector<96x128xi32>
    %12 = arith.cmpi slt, %6, %11 : vector<96x128xi32>
    %cst_8 = arith.constant 0xFF800000 : f32
    %13 = vector.broadcast %cst_8 : f32 to vector<96x128xf32>
    %14 = arith.select %12, %5, %13 : vector<96x128xi1>, vector<96x128xf32>
    %15 = arith.maximumf %10, %14 : vector<96x128xf32>
    %16 = arith.maximumf %1, %15 : vector<96x128xf32>
    %17 = tpu.iota {dimensions = array<i32: 0>} : vector<96x128xi32>
    %c0_i32_9 = arith.constant 0 : i32
    %18 = vector.broadcast %c0_i32_9 : i32 to vector<96x128xi32>
    %19 = arith.cmpi eq, %17, %18 : vector<96x128xi32>
    %c1_i32_10 = arith.constant 1 : i32
    %20 = tpu.dynamic_rotate %16 by %c1_i32_10 dim 0 : vector<96x128xf32>, i32 -> vector<96x128xf32>
    %cst_11 = arith.constant 0xFF800000 : f32
    %21 = vector.broadcast %cst_11 : f32 to vector<96x128xf32>
    %22 = arith.select %19, %21, %20 : vector<96x128xi1>, vector<96x128xf32>
    %c95_i32 = arith.constant 95 : i32
    %23 = vector.broadcast %c95_i32 : i32 to vector<96x128xi32>
    %24 = arith.cmpi eq, %17, %23 : vector<96x128xi32>
    %c95_i32_12 = arith.constant 95 : i32
    %25 = tpu.dynamic_rotate %16 by %c95_i32_12 dim 0 : vector<96x128xf32>, i32 -> vector<96x128xf32>
    %cst_13 = arith.constant 0xFF800000 : f32
    %26 = vector.broadcast %cst_13 : f32 to vector<96x128xf32>
    %27 = arith.select %24, %26, %25 : vector<96x128xi1>, vector<96x128xf32>
    %28 = arith.maximumf %22, %27 : vector<96x128xf32>
    %29 = arith.maximumf %16, %28 : vector<96x128xf32>
    %30 = arith.cmpf oeq, %1, %29 : vector<96x128xf32>
    %cst_14 = arith.constant 0.699999988 : f32
    %31 = vector.broadcast %cst_14 : f32 to vector<96x128xf32>
    %32 = arith.cmpf oge, %1, %31 : vector<96x128xf32>
    %33 = arith.andi %30, %32 : vector<96x128xi1>
    %cst_15 = arith.constant 0.699999988 : f32
    %34 = vector.broadcast %cst_15 : f32 to vector<96x128xf32>
    %35 = arith.cmpf oge, %3, %34 : vector<96x128xf32>
    %36 = arith.andi %33, %35 : vector<96x128xi1>
    %37 = arith.extui %36 : vector<96x128xi1> to vector<96x128xi8>
    %c0_16 = arith.constant 0 : index
    %c0_17 = arith.constant 0 : index
    %c0_18 = arith.constant 0 : index
    %c0_19 = arith.constant 0 : index
    %38 = vector.load %arg4[%c0_16, %c0_17, %c0_18, %c0_19] : memref<1x1x96x128xi8, #tpu.memory_space<vmem>>, vector<1x1x96x128xi8>
    %39 = vector.shape_cast %38 : vector<1x1x96x128xi8> to vector<96x128xi8>
    %40 = vector.shape_cast %37 : vector<96x128xi8> to vector<1x1x96x128xi8>
    tpu.vector_store %arg4[%c0_16, %c0_17, %c0_18, %c0_19], %40 {strides = array<i32>} : memref<1x1x96x128xi8, #tpu.memory_space<vmem>>, vector<1x1x96x128xi8>,
    return
  }
  func.func @transform_0(%arg0: i32, %arg1: i32) -> (i32, i32, i32, i32) {
    %c0_i32 = arith.constant 0 : i32
    %c0_i32_0 = arith.constant 0 : i32
    %c0_i32_1 = arith.constant 0 : i32
    return %arg0, %arg1, %c0_i32, %c0_i32_0 : i32, i32, i32, i32
  }
  func.func @transform_1(%arg0: i32, %arg1: i32) -> (i32, i32, i32, i32) {
    %c0_i32 = arith.constant 0 : i32
    %c0_i32_0 = arith.constant 0 : i32
    %c0_i32_1 = arith.constant 0 : i32
    return %arg0, %arg1, %c0_i32, %c0_i32_0 : i32, i32, i32, i32
  }
  func.func @transform_2(%arg0: i32, %arg1: i32) -> (i32, i32, i32, i32) {
    %c0_i32 = arith.constant 0 : i32
    %c0_i32_0 = arith.constant 0 : i32
    %c0_i32_1 = arith.constant 0 : i32
    return %arg0, %arg1, %c0_i32, %c0_i32_0 : i32, i32, i32, i32
  }
}

</mosaic_0001>

<llo_original>
// kernel: tpu_custom_call.1
$region0: #{tpu_custom_call.1}
  #allocation0 [shape = 'u32[]', space=smem, size = 0x4, offset = 0x4, fixed_abs, tag = 'smem constant byte address 0x4 - core index']
  #allocation1 [shape = 'u32[144,128]{1,0:T(1,128)}', space=vmem, size = 0x12000, scoped, tag = 'internal scratch']
  %s0 = inlined_call_operand.hbm [shape: f32[2,1,96,128], index: 0, kind: input, shape index: {}]
  %s1 = inlined_call_operand.hbm [shape: f32[2,1,96,128], index: 1, kind: input, shape index: {}]
  %s2 = inlined_call_operand.hbm [shape: s8[2,1,96,128], index: 2, kind: output, shape index: {}]
  %s3 = sld [smem:[#allocation0]]
  $region49: #{tpu_custom_call.1} parent=0
    _
  %s5 = ssub.s32 1, %s3
  %s6 = scalar_select 0, %s5, %s3
  $region1: #{tpu_custom_call.1} parent=0
    #allocation2 [shape = 'u8[98304]{0}', space=vmem, size = 0x18000, scoped, tag = 'input window, operand 0']
    #allocation3 [shape = 's32[2]{0}', space=sflag, size = 0x8, scoped, tag = 'scoped memory for tpu_custom_call.1']
    #allocation4 [shape = 's32[2]{0}', space=sflag, size = 0x8, scoped, tag = 'scoped memory for tpu_custom_call.1']
    #allocation5 [shape = 'u8[98304]{0}', space=vmem, size = 0x18000, scoped, tag = 'input window, operand 1']
    #allocation6 [shape = 's32[2]{0}', space=sflag, size = 0x8, scoped, tag = 'scoped memory for tpu_custom_call.1']
    #allocation7 [shape = 'u8[24576]{0}', space=vmem, size = 0x6000, scoped, tag = 'output window, operand 0']
    %7 = vsyncpa [#allocation3], 0
    %s8 = scalar_lea.sflag [#allocation3], 1
    %9 = vsyncpa %s8, 0
    %10 = vsyncpa [#allocation6], 0
    %s11 = scalar_lea.sflag [#allocation6], 1
    %12 = vsyncpa %s11, 0
    %13 = vsyncpa [#allocation4], 0
    %s14 = scalar_lea.sflag [#allocation4], 1
    %15 = vsyncpa %s14, 0
    loop: start=0, step=1, limit=4
    $region2: #{tpu_custom_call.1} parent=1 // loop_pre_header
      _
    $region3: #{tpu_custom_call.1} parent=1 // loop_header
      %s17 = sphi 0, %s21
      %p18 = scmp.ge.s32.totalorder %s17, 4
      %s24 = sphi 0, %s36
      %s25 = sphi 0, %s32
      %s26 = sphi 0, %s24
      %s27 = sphi 0, %s25
      %s28 = sphi 0, %s26
      %s29 = sphi 0, %s27
      %s41 = sphi 0, %s43
      %s44 = sphi 0, %s41
      %s45 = sphi 0, %s44
      %s61 = sphi 0, %s45
      %s69 = sphi 0, %s71
      %s72 = sphi 0, %s69
      %s73 = sphi 0, %s72
      %s89 = sphi 0, %s73
      %s97 = sphi 0, %s99
      %s100 = sphi 0, %s97
      %s101 = sphi 0, %s100
      %s117 = sphi 0, %s101
    $region4: #{tpu_custom_call.1} parent=1 // loop_header_branch
      %20 = sbr.rel (%p18) target = $region8
    $region5: #{tpu_custom_call.1} parent=1 // loop_body
      %s22 = ssub.s32 %s17, 1
      %s23 = ssub.s32 %s17, 2
      %s30 = sadd.s32 1, %s25
      %p31 = scmp.ge.s32.totalorder %s30, 1
      %s32 = scalar_select %p31, 0, %s30
      %s33 = sadd.s32 1, %s24
      %s34 = scalar_select %p31, %s33, %s24
      %p35 = scmp.ge.s32.totalorder %s34, 2
      %s36 = scalar_select %p35, 0, %s34
      %s37 = ssub.s32 %s24, %s36
      %s38 = ssub.s32 %s25, %s32
      %s39 = sor.u32 %s37, %s38
      %p40 = scmp.eq.s32.totalorder %s39, 0
      %s42 = sadd.s32 %s41, 1
      %s43 = scalar_select %p40, %s41, %s42
      %p46 = pneg %p40
      %p47 = scmp.eq.s32.totalorder %s17, 1
      %p48 = por %p46, %p47
      %p49 = scmp.ne.s32.totalorder %s41, %s44
      %p50 = scmp.eq.s32.totalorder %s17, 0
      %p51 = por %p49, %p50
      %p52 = scmp.ne.s32.totalorder %s41, %s44
      %p53 = scmp.eq.s32.totalorder %s22, 1
      %p54 = por %p52, %p53
      %p55 = scmp.ne.s32.totalorder %s44, %s45
      %p56 = scmp.eq.s32.totalorder %s22, 0
      %p57 = por %p55, %p56
      %p58 = scmp.ne.s32.totalorder %s44, %s45
      %p59 = scmp.eq.s32.totalorder %s23, 1
      %p60 = por %p58, %p59
      %p62 = scmp.ne.s32.totalorder %s45, %s61
      %p63 = scmp.eq.s32.totalorder %s23, 0
      %p64 = por %p62, %p63
      %s65 = ssub.s32 %s24, %s36
      %s66 = ssub.s32 %s25, %s32
      %s67 = sor.u32 %s65, %s66
      %p68 = scmp.eq.s32.totalorder %s67, 0
      %s70 = sadd.s32 %s69, 1
      %s71 = scalar_select %p68, %s69, %s70
      %p74 = pneg %p68
      %p75 = scmp.eq.s32.totalorder %s17, 1
      %p76 = por %p74, %p75
      %p77 = scmp.ne.s32.totalorder %s69, %s72
      %p78 = scmp.eq.s32.totalorder %s17, 0
      %p79 = por %p77, %p78
      %p80 = scmp.ne.s32.totalorder %s69, %s72
      %p81 = scmp.eq.s32.totalorder %s22, 1
      %p82 = por %p80, %p81
      %p83 = scmp.ne.s32.totalorder %s72, %s73
      %p84 = scmp.eq.s32.totalorder %s22, 0
      %p85 = por %p83, %p84
      %p86 = scmp.ne.s32.totalorder %s72, %s73
      %p87 = scmp.eq.s32.totalorder %s23, 1
      %p88 = por %p86, %p87
      %p90 = scmp.ne.s32.totalorder %s73, %s89
      %p91 = scmp.eq.s32.totalorder %s23, 0
      %p92 = por %p90, %p91
      %s93 = ssub.s32 %s24, %s36
      %s94 = ssub.s32 %s25, %s32
      %s95 = sor.u32 %s93, %s94
      %p96 = scmp.eq.s32.totalorder %s95, 0
      %s98 = sadd.s32 %s97, 1
      %s99 = scalar_select %p96, %s97, %s98
      %p102 = pneg %p96
      %p103 = scmp.eq.s32.totalorder %s17, 1
      %p104 = por %p102, %p103
      %p105 = scmp.ne.s32.totalorder %s97, %s100
      %p106 = scmp.eq.s32.totalorder %s17, 0
      %p107 = por %p105, %p106
      %p108 = scmp.ne.s32.totalorder %s97, %s100
      %p109 = scmp.eq.s32.totalorder %s22, 1
      %p110 = por %p108, %p109
      %p111 = scmp.ne.s32.totalorder %s100, %s101
      %p112 = scmp.eq.s32.totalorder %s22, 0
      %p113 = por %p111, %p112
      %p114 = scmp.ne.s32.totalorder %s100, %s101
      %p115 = scmp.eq.s32.totalorder %s23, 1
      %p116 = por %p114, %p115
      %p118 = scmp.ne.s32.totalorder %s101, %s117
      %p119 = scmp.eq.s32.totalorder %s23, 0
      %p120 = por %p118, %p119
      %p121 = scmp.le.s32.totalorder 1, %s17
      %p122 = scmp.lt.s32.totalorder %s17, 3
      %p123 = pnand %p121, %p122
      %p124 = pneg %p123
      // Predicated region
      $region9: #{tpu_custom_call.1} parent=5 // pred_check
        _
      $region10: #{tpu_custom_call.1} parent=5 // pred_check_branch
        %126 = sbr.rel (%p123) target = $region12
      $region11: #{tpu_custom_call.1} parent=5 // pred_region
        %s127 = ssub.s32 %s17, 1
      $region12: #{tpu_custom_call.1} parent=5 // pred_fallthru
        _
      %p128 = scmp.lt.s32.totalorder %s17, 2
      // Predicated region
      $region13: #{tpu_custom_call.1} parent=5 // pred_check
        %p129 = pneg %p128
      $region14: #{tpu_custom_call.1} parent=5 // pred_check_branch
        %131 = sbr.rel (%p129) target = $region16
      $region15: #{tpu_custom_call.1} parent=5 // pred_region
        // Predicated region
        $region17: #{tpu_custom_call.1} parent=15 // pred_check
          %p132 = pneg %p51
        $region18: #{tpu_custom_call.1} parent=15 // pred_check_branch
          %134 = sbr.rel (%p132) target = $region20
        $region19: #{tpu_custom_call.1} parent=15 // pred_region
          %s135 = sand.u32 %s41, 1
          %s136 = scalar_lea.sflag [#allocation3], %s135
          %s137 = sand.u32 %s41, 1
          %s138 = smul.addr %s137, 96
          %s139 = scalar_lea.vmem [#allocation2], %s138
          %s141 = ssub.s32 1536, 1536
          %142 = vsyncadd %s136, %s141
          %s143 = smul.addr %s25, 12
          %s144 = smul.addr %s24, 12
          %s145 = sadd.s32 %s143, %s144
          %s146 = smul.addr %s145, 128
          %s147 = scalar_lea.hbm %s0, %s146
          %s148 = sshll.u32 %s139, 4
          %s149 = int_to_ptr.vmem [resolvable:$true] %s148
          %154 = dma.hbm_to_vmem [thread:$0]  %s147, 1536, %s149, %s136, 128, 128, 8
        $region20: #{tpu_custom_call.1} parent=15 // pred_fallthru
          _
        // Predicated region
        $region21: #{tpu_custom_call.1} parent=15 // pred_check
          %p155 = pneg %p79
        $region22: #{tpu_custom_call.1} parent=15 // pred_check_branch
          %157 = sbr.rel (%p155) target = $region24
        $region23: #{tpu_custom_call.1} parent=15 // pred_region
          %s158 = sand.u32 %s69, 1
          %s159 = scalar_lea.sflag [#allocation6], %s158
          %s160 = sand.u32 %s69, 1
          %s161 = smul.addr %s160, 96
          %s162 = scalar_lea.vmem [#allocation5], %s161
          %s164 = ssub.s32 1536, 1536
          %165 = vsyncadd %s159, %s164
          %s166 = smul.addr %s25, 12
          %s167 = smul.addr %s24, 12
          %s168 = sadd.s32 %s166, %s167
          %s169 = smul.addr %s168, 128
          %s170 = scalar_lea.hbm %s1, %s169
          %s171 = sshll.u32 %s162, 4
          %s172 = int_to_ptr.vmem [resolvable:$true] %s171
          %177 = dma.hbm_to_vmem [thread:$0]  %s170, 1536, %s172, %s159, 128, 128, 8
        $region24: #{tpu_custom_call.1} parent=15 // pred_fallthru
          _
      $region16: #{tpu_custom_call.1} parent=5 // pred_fallthru
        _
      %p178 = scmp.le.s32.totalorder 1, %s17
      %p179 = scmp.lt.s32.totalorder %s17, 3
      %p180 = pnand %p178, %p179
      %p181 = pneg %p180
      // Predicated region
      $region25: #{tpu_custom_call.1} parent=5 // pred_check
        _
      $region26: #{tpu_custom_call.1} parent=5 // pred_check_branch
        %183 = sbr.rel (%p180) target = $region28
      $region27: #{tpu_custom_call.1} parent=5 // pred_region
        %s184 = ssub.s32 %s17, 1
        %s185 = sand.u32 %s44, 1
        %s186 = scalar_lea.sflag [#allocation3], %s185
        %s187 = sand.u32 %s44, 1
        %s188 = smul.addr %s187, 96
        %s189 = scalar_lea.vmem [#allocation2], %s188
        // Predicated region
        $region29: #{tpu_custom_call.1} parent=27 // pred_check
          %p190 = pneg %p57
        $region30: #{tpu_custom_call.1} parent=27 // pred_check_branch
          %192 = sbr.rel (%p190) target = $region32
        $region31: #{tpu_custom_call.1} parent=27 // pred_region
          %193 = dma.done %s186, 1536
        $region32: #{tpu_custom_call.1} parent=27 // pred_fallthru
          _
        %s194 = sand.u32 %s72, 1
        %s195 = scalar_lea.sflag [#allocation6], %s194
        %s196 = sand.u32 %s72, 1
        %s197 = smul.addr %s196, 96
        %s198 = scalar_lea.vmem [#allocation5], %s197
        // Predicated region
        $region33: #{tpu_custom_call.1} parent=27 // pred_check
          %p199 = pneg %p85
        $region34: #{tpu_custom_call.1} parent=27 // pred_check_branch
          %201 = sbr.rel (%p199) target = $region36
        $region35: #{tpu_custom_call.1} parent=27 // pred_region
          %202 = dma.done %s195, 1536
        $region36: #{tpu_custom_call.1} parent=27 // pred_fallthru
          _
        %s203 = sand.u32 %s44, 1
        %s204 = scalar_lea.sflag [#allocation3], %s203
        %s205 = sand.u32 %s44, 1
        %s206 = smul.addr %s205, 96
        %s207 = scalar_lea.vmem [#allocation2], %s206
        %p208 = pneg %p57
        %p209 = pneg %p54
        %s210 = sand.u32 %s72, 1
        %s211 = scalar_lea.sflag [#allocation6], %s210
        %s212 = sand.u32 %s72, 1
        %s213 = smul.addr %s212, 96
        %s214 = scalar_lea.vmem [#allocation5], %s213
        %p215 = pneg %p85
        %p216 = pneg %p82
        %p217 = pneg %p113
        %p218 = pneg %p110
        %s219 = sand.u32 %s100, 1
        %s220 = scalar_lea.sflag [#allocation4], %s219
        %s221 = sand.u32 %s100, 1
        %s222 = smul.addr %s221, 24
        %s223 = scalar_lea.vmem [#allocation7], %s222
        %v226 = vld [vmem:[%s189] sm:$0xff]
        %v227 = vld [vmem:[%s189 + $0x8] sm:$0xff]
        %v228 = vld [vmem:[%s189 + $0x10] sm:$0xff]
        %v229 = vld [vmem:[%s189 + $0x18] sm:$0xff]
        %v230 = vld [vmem:[%s189 + $0x20] sm:$0xff]
        %v231 = vld [vmem:[%s189 + $0x28] sm:$0xff]
        %v232 = vld [vmem:[%s189 + $0x30] sm:$0xff]
        %v233 = vld [vmem:[%s189 + $0x38] sm:$0xff]
        %v234 = vld [vmem:[%s189 + $0x40] sm:$0xff]
        %v235 = vld [vmem:[%s189 + $0x48] sm:$0xff]
        %v236 = vld [vmem:[%s189 + $0x50] sm:$0xff]
        %v237 = vld [vmem:[%s189 + $0x58] sm:$0xff]
        %v238 = vld [vmem:[%s198] sm:$0xff]
        %v239 = vld [vmem:[%s198 + $0x8] sm:$0xff]
        %v240 = vld [vmem:[%s198 + $0x10] sm:$0xff]
        %v241 = vld [vmem:[%s198 + $0x18] sm:$0xff]
        %v242 = vld [vmem:[%s198 + $0x20] sm:$0xff]
        %v243 = vld [vmem:[%s198 + $0x28] sm:$0xff]
        %v244 = vld [vmem:[%s198 + $0x30] sm:$0xff]
        %v245 = vld [vmem:[%s198 + $0x38] sm:$0xff]
        %v246 = vld [vmem:[%s198 + $0x40] sm:$0xff]
        %v247 = vld [vmem:[%s198 + $0x48] sm:$0xff]
        %v248 = vld [vmem:[%s198 + $0x50] sm:$0xff]
        %v249 = vld [vmem:[%s198 + $0x58] sm:$0xff]
        %250 = vrot.lane.b32.xlu0 %v226, 1
        %v251 = vpop.permute.xlu0 %250
        %252 = vrot.lane.b32.xlu0 %v227, 1
        %v253 = vpop.permute.xlu0 %252
        %254 = vrot.lane.b32.xlu0 %v228, 1
        %v255 = vpop.permute.xlu0 %254
        %256 = vrot.lane.b32.xlu0 %v229, 1
        %v257 = vpop.permute.xlu0 %256
        %258 = vrot.lane.b32.xlu0 %v230, 1
        %v259 = vpop.permute.xlu0 %258
        %260 = vrot.lane.b32.xlu0 %v231, 1
        %v261 = vpop.permute.xlu0 %260
        %262 = vrot.lane.b32.xlu0 %v232, 1
        %v263 = vpop.permute.xlu0 %262
        %264 = vrot.lane.b32.xlu0 %v233, 1
        %v265 = vpop.permute.xlu0 %264
        %266 = vrot.lane.b32.xlu0 %v234, 1
        %v267 = vpop.permute.xlu0 %266
        %268 = vrot.lane.b32.xlu0 %v235, 1
        %v269 = vpop.permute.xlu0 %268
        %270 = vrot.lane.b32.xlu0 %v236, 1
        %v271 = vpop.permute.xlu0 %270
        %272 = vrot.lane.b32.xlu0 %v237, 1
        %v273 = vpop.permute.xlu0 %272
        %274 = vrot.lane.b32.xlu0 %v226, 127
        %v275 = vpop.permute.xlu0 %274
        %276 = vrot.lane.b32.xlu0 %v227, 127
        %v277 = vpop.permute.xlu0 %276
        %278 = vrot.lane.b32.xlu0 %v228, 127
        %v279 = vpop.permute.xlu0 %278
        %280 = vrot.lane.b32.xlu0 %v229, 127
        %v281 = vpop.permute.xlu0 %280
        %282 = vrot.lane.b32.xlu0 %v230, 127
        %v283 = vpop.permute.xlu0 %282
        %284 = vrot.lane.b32.xlu0 %v231, 127
        %v285 = vpop.permute.xlu0 %284
        %286 = vrot.lane.b32.xlu0 %v232, 127
        %v287 = vpop.permute.xlu0 %286
        %288 = vrot.lane.b32.xlu0 %v233, 127
        %v289 = vpop.permute.xlu0 %288
        %290 = vrot.lane.b32.xlu0 %v234, 127
        %v291 = vpop.permute.xlu0 %290
        %292 = vrot.lane.b32.xlu0 %v235, 127
        %v293 = vpop.permute.xlu0 %292
        %294 = vrot.lane.b32.xlu0 %v236, 127
        %v295 = vpop.permute.xlu0 %294
        %296 = vrot.lane.b32.xlu0 %v237, 127
        %v297 = vpop.permute.xlu0 %296
        %v298 = vlaneseq
        %v299 = vand.u32 %v298, 127
        %vm300 = vcmp.gt.s32.totalorder %v299, 0
        %v301 = vsel %vm300, %v251, -inf
        %v302 = vsel %vm300, %v253, -inf
        %v303 = vsel %vm300, %v255, -inf
        %v304 = vsel %vm300, %v257, -inf
        %v305 = vsel %vm300, %v259, -inf
        %v306 = vsel %vm300, %v261, -inf
        %v307 = vsel %vm300, %v263, -inf
        %v308 = vsel %vm300, %v265, -inf
        %v309 = vsel %vm300, %v267, -inf
        %v310 = vsel %vm300, %v269, -inf
        %v311 = vsel %vm300, %v271, -inf
        %v312 = vsel %vm300, %v273, -inf
        %vm313 = vcmp.lt.s32.totalorder %v299, 127
        %v314 = vsel %vm313, %v275, -inf
        %v315 = vsel %vm313, %v277, -inf
        %v316 = vsel %vm313, %v279, -inf
        %v317 = vsel %vm313, %v281, -inf
        %v318 = vsel %vm313, %v283, -inf
        %v319 = vsel %vm313, %v285, -inf
        %v320 = vsel %vm313, %v287, -inf
        %v321 = vsel %vm313, %v289, -inf
        %v322 = vsel %vm313, %v291, -inf
        %v323 = vsel %vm313, %v293, -inf
        %v324 = vsel %vm313, %v295, -inf
        %v325 = vsel %vm313, %v297, -inf
        %v326 = vmax.f32 %v301, %v314
        %v327 = vmax.f32 %v302, %v315
        %v328 = vmax.f32 %v303, %v316
        %v329 = vmax.f32 %v304, %v317
        %v330 = vmax.f32 %v305, %v318
        %v331 = vmax.f32 %v306, %v319
        %v332 = vmax.f32 %v307, %v320
        %v333 = vmax.f32 %v308, %v321
        %v334 = vmax.f32 %v309, %v322
        %v335 = vmax.f32 %v310, %v323
        %v336 = vmax.f32 %v311, %v324
        %v337 = vmax.f32 %v312, %v325
        %v338 = vmax.f32 %v226, %v326
        %v339 = vmax.f32 %v227, %v327
        %v340 = vmax.f32 %v228, %v328
        %v341 = vmax.f32 %v229, %v329
        %v342 = vmax.f32 %v230, %v330
        %v343 = vmax.f32 %v231, %v331
        %v344 = vmax.f32 %v232, %v332
        %v345 = vmax.f32 %v233, %v333
        %v346 = vmax.f32 %v234, %v334
        %v347 = vmax.f32 %v235, %v335
        %v348 = vmax.f32 %v236, %v336
        %v349 = vmax.f32 %v237, %v337
        %v350 = vlaneseq
        %v351 = vshrl.u32 %v350, 7
        %v352 = vadd.s32 %v351, 8
        %v353 = vadd.s32 %v351, 16
        %v354 = vadd.s32 %v351, 24
        %v355 = vadd.s32 %v351, 32
        %v356 = vadd.s32 %v351, 40
        %v357 = vadd.s32 %v351, 48
        %v358 = vadd.s32 %v351, 56
        %v359 = vadd.s32 %v351, 64
        %v360 = vadd.s32 %v351, 72
        %v361 = vadd.s32 %v351, 80
        %v362 = vadd.s32 %v351, 88
        %vm363 = vcmp.eq.s32.totalorder %v351, 0
        %vm364 = vcmp.eq.s32.totalorder %v352, 0
        %vm365 = vcmp.eq.s32.totalorder %v353, 0
        %vm366 = vcmp.eq.s32.totalorder %v354, 0
        %vm367 = vcmp.eq.s32.totalorder %v355, 0
        %vm368 = vcmp.eq.s32.totalorder %v356, 0
        %vm369 = vcmp.eq.s32.totalorder %v357, 0
        %vm370 = vcmp.eq.s32.totalorder %v358, 0
        %vm371 = vcmp.eq.s32.totalorder %v359, 0
        %vm372 = vcmp.eq.s32.totalorder %v360, 0
        %vm373 = vcmp.eq.s32.totalorder %v361, 0
        %vm374 = vcmp.eq.s32.totalorder %v362, 0
        %v375 = vrot.slane %v338, 7
        %v376 = vrot.slane %v339, 7
        %v377 = vrot.slane %v340, 7
        %v378 = vrot.slane %v341, 7
        %v379 = vrot.slane %v342, 7
        %v380 = vrot.slane %v343, 7
        %v381 = vrot.slane %v344, 7
        %v382 = vrot.slane %v345, 7
        %v383 = vrot.slane %v346, 7
        %v384 = vrot.slane %v347, 7
        %v385 = vrot.slane %v348, 7
        %v386 = vrot.slane %v349, 7
        %vm387 = vcmp.lt.s32.totalorder %v351, 1
        %v388 = vsel %vm387, %v385, %v386
        %v389 = vsel %vm387, %v384, %v385
        %v390 = vsel %vm387, %v383, %v384
        %v391 = vsel %vm387, %v382, %v383
        %v392 = vsel %vm387, %v381, %v382
        %v393 = vsel %vm387, %v380, %v381
        %v394 = vsel %vm387, %v379, %v380
        %v395 = vsel %vm387, %v378, %v379
        %v396 = vsel %vm387, %v377, %v378
        %v397 = vsel %vm387, %v376, %v377
        %v398 = vsel %vm387, %v375, %v376
        %v399 = vsel %vm387, %v386, %v375
        %v400 = vsel %vm363, -inf, %v399
        %v401 = vsel %vm364, -inf, %v398
        %v402 = vsel %vm365, -inf, %v397
        %v403 = vsel %vm366, -inf, %v396
        %v404 = vsel %vm367, -inf, %v395
        %v405 = vsel %vm368, -inf, %v394
        %v406 = vsel %vm369, -inf, %v393
        %v407 = vsel %vm370, -inf, %v392
        %v408 = vsel %vm371, -inf, %v391
        %v409 = vsel %vm372, -inf, %v390
        %v410 = vsel %vm373, -inf, %v389
        %v411 = vsel %vm374, -inf, %v388
        %vm412 = vcmp.eq.s32.totalorder %v351, 95
        %vm413 = vcmp.eq.s32.totalorder %v352, 95
        %vm414 = vcmp.eq.s32.totalorder %v353, 95
        %vm415 = vcmp.eq.s32.totalorder %v354, 95
        %vm416 = vcmp.eq.s32.totalorder %v355, 95
        %vm417 = vcmp.eq.s32.totalorder %v356, 95
        %vm418 = vcmp.eq.s32.totalorder %v357, 95
        %vm419 = vcmp.eq.s32.totalorder %v358, 95
        %vm420 = vcmp.eq.s32.totalorder %v359, 95
        %vm421 = vcmp.eq.s32.totalorder %v360, 95
        %vm422 = vcmp.eq.s32.totalorder %v361, 95
        %vm423 = vcmp.eq.s32.totalorder %v362, 95
        %v424 = vrot.slane %v338, 1
        %v425 = vrot.slane %v339, 1
        %v426 = vrot.slane %v340, 1
        %v427 = vrot.slane %v341, 1
        %v428 = vrot.slane %v342, 1
        %v429 = vrot.slane %v343, 1
        %v430 = vrot.slane %v344, 1
        %v431 = vrot.slane %v345, 1
        %v432 = vrot.slane %v346, 1
        %v433 = vrot.slane %v347, 1
        %v434 = vrot.slane %v348, 1
        %v435 = vrot.slane %v349, 1
        %vm436 = vcmp.lt.s32.totalorder %v351, 7
        %v437 = vsel %vm436, %v434, %v435
        %v438 = vsel %vm436, %v433, %v434
        %v439 = vsel %vm436, %v432, %v433
        %v440 = vsel %vm436, %v431, %v432
        %v441 = vsel %vm436, %v430, %v431
        %v442 = vsel %vm436, %v429, %v430
        %v443 = vsel %vm436, %v428, %v429
        %v444 = vsel %vm436, %v427, %v428
        %v445 = vsel %vm436, %v426, %v427
        %v446 = vsel %vm436, %v425, %v426
        %v447 = vsel %vm436, %v424, %v425
        %v448 = vsel %vm436, %v435, %v424
        %v449 = vsel %vm412, -inf, %v447
        %v450 = vsel %vm413, -inf, %v446
        %v451 = vsel %vm414, -inf, %v445
        %v452 = vsel %vm415, -inf, %v444
        %v453 = vsel %vm416, -inf, %v443
        %v454 = vsel %vm417, -inf, %v442
        %v455 = vsel %vm418, -inf, %v441
        %v456 = vsel %vm419, -inf, %v440
        %v457 = vsel %vm420, -inf, %v439
        %v458 = vsel %vm421, -inf, %v438
        %v459 = vsel %vm422, -inf, %v437
        %v460 = vsel %vm423, -inf, %v448
        %v461 = vmax.f32 %v400, %v449
        %v462 = vmax.f32 %v401, %v450
        %v463 = vmax.f32 %v402, %v451
        %v464 = vmax.f32 %v403, %v452
        %v465 = vmax.f32 %v404, %v453
        %v466 = vmax.f32 %v405, %v454
        %v467 = vmax.f32 %v406, %v455
        %v468 = vmax.f32 %v407, %v456
        %v469 = vmax.f32 %v408, %v457
        %v470 = vmax.f32 %v409, %v458
        %v471 = vmax.f32 %v410, %v459
        %v472 = vmax.f32 %v411, %v460
        %v473 = vmax.f32 %v338, %v461
        %v474 = vmax.f32 %v339, %v462
        %v475 = vmax.f32 %v340, %v463
        %v476 = vmax.f32 %v341, %v464
        %v477 = vmax.f32 %v342, %v465
        %v478 = vmax.f32 %v343, %v466
        %v479 = vmax.f32 %v344, %v467
        %v480 = vmax.f32 %v345, %v468
        %v481 = vmax.f32 %v346, %v469
        %v482 = vmax.f32 %v347, %v470
        %v483 = vmax.f32 %v348, %v471
        %v484 = vmax.f32 %v349, %v472
        %vm485 = vcmp.eq.f32.partialorder %v226, %v473
        %vm486 = vcmp.eq.f32.partialorder %v227, %v474
        %vm487 = vcmp.eq.f32.partialorder %v228, %v475
        %vm488 = vcmp.eq.f32.partialorder %v229, %v476
        %vm489 = vcmp.eq.f32.partialorder %v230, %v477
        %vm490 = vcmp.eq.f32.partialorder %v231, %v478
        %vm491 = vcmp.eq.f32.partialorder %v232, %v479
        %vm492 = vcmp.eq.f32.partialorder %v233, %v480
        %vm493 = vcmp.eq.f32.partialorder %v234, %v481
        %vm494 = vcmp.eq.f32.partialorder %v235, %v482
        %vm495 = vcmp.eq.f32.partialorder %v236, %v483
        %vm496 = vcmp.eq.f32.partialorder %v237, %v484
        %vm497 = vcmp.ge.f32.partialorder %v226, 0.7
        %vm498 = vcmp.ge.f32.partialorder %v227, 0.7
        %vm499 = vcmp.ge.f32.partialorder %v228, 0.7
        %vm500 = vcmp.ge.f32.partialorder %v229, 0.7
        %vm501 = vcmp.ge.f32.partialorder %v230, 0.7
        %vm502 = vcmp.ge.f32.partialorder %v231, 0.7
        %vm503 = vcmp.ge.f32.partialorder %v232, 0.7
        %vm504 = vcmp.ge.f32.partialorder %v233, 0.7
        %vm505 = vcmp.ge.f32.partialorder %v234, 0.7
        %vm506 = vcmp.ge.f32.partialorder %v235, 0.7
        %vm507 = vcmp.ge.f32.partialorder %v236, 0.7
        %vm508 = vcmp.ge.f32.partialorder %v237, 0.7
        %vm509 = vmand %vm485, %vm497
        %vm510 = vmand %vm486, %vm498
        %vm511 = vmand %vm487, %vm499
        %vm512 = vmand %vm488, %vm500
        %vm513 = vmand %vm489, %vm501
        %vm514 = vmand %vm490, %vm502
        %vm515 = vmand %vm491, %vm503
        %vm516 = vmand %vm492, %vm504
        %vm517 = vmand %vm493, %vm505
        %vm518 = vmand %vm494, %vm506
        %vm519 = vmand %vm495, %vm507
        %vm520 = vmand %vm496, %vm508
        %vm521 = vcmp.ge.f32.partialorder %v238, 0.7
        %vm522 = vcmp.ge.f32.partialorder %v239, 0.7
        %vm523 = vcmp.ge.f32.partialorder %v240, 0.7
        %vm524 = vcmp.ge.f32.partialorder %v241, 0.7
        %vm525 = vcmp.ge.f32.partialorder %v242, 0.7
        %vm526 = vcmp.ge.f32.partialorder %v243, 0.7
        %vm527 = vcmp.ge.f32.partialorder %v244, 0.7
        %vm528 = vcmp.ge.f32.partialorder %v245, 0.7
        %vm529 = vcmp.ge.f32.partialorder %v246, 0.7
        %vm530 = vcmp.ge.f32.partialorder %v247, 0.7
        %vm531 = vcmp.ge.f32.partialorder %v248, 0.7
        %vm532 = vcmp.ge.f32.partialorder %v249, 0.7
        %vm533 = vmand %vm509, %vm521
        %vm534 = vmand %vm510, %vm522
        %vm535 = vmand %vm511, %vm523
        %vm536 = vmand %vm512, %vm524
        %vm537 = vmand %vm513, %vm525
        %vm538 = vmand %vm514, %vm526
        %vm539 = vmand %vm515, %vm527
        %vm540 = vmand %vm516, %vm528
        %vm541 = vmand %vm517, %vm529
        %vm542 = vmand %vm518, %vm530
        %vm543 = vmand %vm519, %vm531
        %vm544 = vmand %vm520, %vm532
        %vm545 = vmpackc.low %vm534, %vm533
        %vm546 = vmpackc.low %vm536, %vm535
        %vm547 = vmpackc.even %vm546, %vm545
        %vm548 = vmpackc.low %vm538, %vm537
        %vm549 = vmpackc.low %vm540, %vm539
        %vm550 = vmpackc.even %vm549, %vm548
        %vm551 = vmpackc.low %vm542, %vm541
        %vm552 = vmpackc.low %vm544, %vm543
        %vm553 = vmpackc.even %vm552, %vm551
        %v554 = vsel %vm547, 16843009, 0
        %v555 = vsel %vm550, 16843009, 0
        %v556 = vsel %vm553, 16843009, 0
        %557 = vst [vmem:[%s223] sm:$0xff] %v554
        %558 = vst [vmem:[%s223 + $0x8] sm:$0xff] %v555
        %559 = vst [vmem:[%s223 + $0x10] sm:$0xff] %v556
        %s560 = sand.u32 %s100, 1
        %s561 = scalar_lea.sflag [#allocation4], %s560
        %s562 = sand.u32 %s100, 1
        %s563 = smul.addr %s562, 24
        %s564 = scalar_lea.vmem [#allocation7], %s563
        // Predicated region
        $region37: #{tpu_custom_call.1} parent=27 // pred_check
          %p565 = pneg %p110
        $region38: #{tpu_custom_call.1} parent=27 // pred_check_branch
          %567 = sbr.rel (%p565) target = $region40
        $region39: #{tpu_custom_call.1} parent=27 // pred_region
          %s569 = ssub.s32 384, 384
          %570 = vsyncadd %s561, %s569
          %s571 = smul.addr %s27, 3
          %s572 = smul.addr %s26, 3
          %s573 = sadd.s32 %s571, %s572
          %s574 = smul.addr %s573, 128
          %s575 = scalar_lea.hbm %s2, %s574
          %s576 = sshll.u32 %s564, 4
          %s577 = int_to_ptr.vmem [resolvable:$true] %s576
          %582 = dma.vmem_to_hbm [thread:$0]  %s577, 384, %s575, %s561, 128, 128, 8
        $region40: #{tpu_custom_call.1} parent=27 // pred_fallthru
          _
      $region28: #{tpu_custom_call.1} parent=5 // pred_fallthru
        _
      %p583 = scmp.le.s32.totalorder 2, %s17
      // Predicated region
      $region41: #{tpu_custom_call.1} parent=5 // pred_check
        %p584 = pneg %p583
      $region42: #{tpu_custom_call.1} parent=5 // pred_check_branch
        %586 = sbr.rel (%p584) target = $region44
      $region43: #{tpu_custom_call.1} parent=5 // pred_region
        %s587 = ssub.s32 %s17, 2
        // Predicated region
        $region45: #{tpu_custom_call.1} parent=43 // pred_check
          %p588 = pneg %p116
        $region46: #{tpu_custom_call.1} parent=43 // pred_check_branch
          %590 = sbr.rel (%p588) target = $region48
        $region47: #{tpu_custom_call.1} parent=43 // pred_region
          %s591 = sand.u32 %s101, 1
          %s592 = scalar_lea.sflag [#allocation4], %s591
          %s593 = sand.u32 %s101, 1
          %s594 = smul.addr %s593, 24
          %s595 = scalar_lea.vmem [#allocation7], %s594
          %596 = dma.done %s592, 384
        $region48: #{tpu_custom_call.1} parent=43 // pred_fallthru
          _
      $region44: #{tpu_custom_call.1} parent=5 // pred_fallthru
        _
    $region6: #{tpu_custom_call.1} parent=1 // loop_footer
      %s21 = sadd.s32 1, %s17
    $region7: #{tpu_custom_call.1} parent=1 // loop_footer_branch
      %16 = sbr.rel target = $region3
    $region8: #{tpu_custom_call.1} parent=1 // loop_exit
      _
    %597 = vsyncpa [#allocation3], 1
    %s598 = scalar_lea.sflag [#allocation3], 1
    %599 = vsyncpa %s598, 1
    %600 = vsyncpa [#allocation6], 1
    %s601 = scalar_lea.sflag [#allocation6], 1
    %602 = vsyncpa %s601, 1
    %603 = vsyncpa [#allocation4], 1
    %s604 = scalar_lea.sflag [#allocation4], 1
    %605 = vsyncpa %s604, 1

</llo_original>
